<compile_context>
chip_gen: v5e
topology: v5e:2x2
jax: 0.10.0
libtpu: 0.0.40
codegen_flags: <defaults>
</compile_context>

<pallas_src>
import jax
import jax.numpy as jnp
from jax.experimental import pallas as pl
from jax.experimental.pallas import tpu as pltpu


def _tracker_kernel(pos_ref, lat_ref, w_ref, b_ref, sel_ref, noise_ref, out_ref):
    """pos (BO,C), lat (BO,L), w (5,L,L), b (8,L), sel (3B,3BO), noise (BO,1) -> out (B,C)."""
    C = pos_ref.shape[1]

    x = lat_ref[...]                                   # (BO, L) f32
    bs = b_ref[...]                                    # (8, L)

    def linres_layers(h, wa, ba, wb, bb):
        # 'layers' branch of LinearResidual: ReLU -> Linear -> ReLU -> Linear
        h = jnp.maximum(h, 0.0)
        h = jnp.dot(h, wa, preferred_element_type=jnp.float32) + ba
        h = jnp.maximum(h, 0.0)
        return jnp.dot(h, wb, preferred_element_type=jnp.float32) + bb

    # TODO(synk): LinearResidual / LambdaModule source was not provided; assumed
    # y = skip(x) + Linear(ReLU(Linear(ReLU(x)))) with identity skip for L->L blocks
    # and channel-mean skip for the dim-changing L->1 block.
    x = x + linres_layers(x, w_ref[0], bs[0:1, :], w_ref[1], bs[1:2, :])
    x = x + linres_layers(x, w_ref[2], bs[2:3, :], w_ref[3], bs[3:4, :])

    # LinearResidual(L, 1): hidden Linear on the MXU; final L->1 projection as a VPU
    # multiply + lane reduction (row 5 of b_slab holds the L->1 weights).
    h = jnp.maximum(x, 0.0)
    h = jnp.dot(h, w_ref[4], preferred_element_type=jnp.float32) + bs[4:5, :]
    h = jnp.maximum(h, 0.0)
    g_lin = jnp.sum(h * bs[5:6, :], axis=-1, keepdims=True) + bs[6:7, 0:1]   # (BO, 1)
    skip = jnp.mean(x, axis=-1, keepdims=True)
    g_raw = skip + g_lin                                                     # (BO, 1)

    # Softmax over the objects of each batch group.  Global-max shift is valid
    # per group (softmax is shift-invariant).  Normalization is deferred: with
    # g = e / D and the post-softmax noise gate g' = g + g*(1-g)*n,
    #   out_b = (1/D_b) * sum_o pos*e*(1+n)  -  (1/D_b^2) * sum_o pos*e^2*n,
    # so a single block-diagonal selector matmul over the row-stacked payload
    # [pos*e*(1+n) ; pos*e^2*n ; e] yields both numerators and D_b at once.
    m = jnp.max(g_raw, axis=0, keepdims=True)
    e = jnp.exp(g_raw - m)                                                   # (BO, 1)
    n = noise_ref[...]                                                       # (BO, 1)

    pe = pos_ref[...] * e                                                    # (BO, C)
    payload = jnp.concatenate(
        [pe * (1.0 + n), pe * (e * n), jnp.broadcast_to(e, pe.shape)], axis=0
    )                                                                        # (3BO, C)
    agg = jnp.dot(sel_ref[...], payload, preferred_element_type=jnp.float32)  # (3B, C)

    B = agg.shape[0] // 3
    inv_d = 1.0 / agg[2 * B:, 0:1]                                           # (B, 1)
    out_ref[...] = agg[:B] * inv_d - agg[B:2 * B] * (inv_d * inv_d)          # (B, C)


def init_params(key, latent_size):
    """Deterministic synthetic weights for the 3 LinearResidual blocks."""
    L = latent_size
    shapes = [
        (L, L), (1, L), (L, L), (1, L),   # LinearResidual 1 (hidden = L)
        (L, L), (1, L), (L, L), (1, L),   # LinearResidual 2
        (L, L), (1, L), (L, 1), (1, 1),   # LinearResidual 3 (L -> 1, hidden = L)
    ]
    params = []
    for s in shapes:
        key, sub = jax.random.split(key)
        fan_in = s[0] if s[0] > 1 else s[1]
        params.append(jax.random.normal(sub, s, jnp.float32) / jnp.sqrt(fan_in))
    return params


def pack_params(params):
    """Pack the 12 small tensors into one weight slab and one bias slab (2 DMAs)."""
    w1, b1, w2, b2, w3, b3, w4, b4, w5, b5, w6, b6 = params
    L = w1.shape[0]
    w_slab = jnp.stack([w1, w2, w3, w4, w5], axis=0)                 # (5, L, L)
    b_slab = jnp.concatenate(
        [
            b1, b2, b3, b4, b5,                                      # rows 0..4
            w6.T,                                                    # row 5: L->1 weights
            jnp.broadcast_to(b6, (1, L)),                            # row 6: final bias
            jnp.zeros((1, L), jnp.float32),                          # row 7: pad
        ],
        axis=0,
    )                                                                # (8, L)
    return w_slab, b_slab


def make_selector(batch, num_objects, copies=3):
    """Block-diagonal row-sum selector (host-precomputed, static in B and O).

    For copy k, sel[k*B + b, k*B*O + b*O + o] = 1, so one matmul sums each group of O
    consecutive rows of the row-stacked payload into its batch slot.
    """
    rows = jnp.arange(copies * batch)[:, None]
    cols = jnp.arange(copies * batch * num_objects)[None, :] // num_objects
    return (rows == cols).astype(jnp.float32)                       # (3B, 3*B*O)


@jax.jit
def cater_snitch_tracker(position, latent_state, w_slab, b_slab, sel, noise_key):
    """position: (B*O, C), latent_state: (B*O, L), sel: (3B, 3*B*O) -> (B, C)."""
    n_rows, channels = position.shape
    batch = sel.shape[0] // 3

    # Fresh gate noise per call (torch.randn_like equivalent); fused under jit.
    noise = jax.random.normal(noise_key, (n_rows, 1), jnp.float32)

    vmem = pl.BlockSpec(memory_space=pltpu.MemorySpace.VMEM)
    return pl.pallas_call(
        _tracker_kernel,
        out_shape=jax.ShapeDtypeStruct((batch, channels), jnp.float32),
        in_specs=[vmem] * 6,
        out_specs=vmem,
    )(
        position.astype(jnp.float32),
        latent_state.astype(jnp.float32),
        w_slab,
        b_slab,
        sel,
        noise,
    )


if __name__ == "__main__":
    latent_size = 32
    num_objects = 8
    batch = 2
    pos_channels = 3   # (x, y, z)-style position code per object

    key = jax.random.PRNGKey(0)
    k_pos, k_lat, k_par, k_noise = jax.random.split(key, 4)

    position = jax.random.normal(k_pos, (batch * num_objects, pos_channels), jnp.float32)
    latent_state = jax.random.normal(k_lat, (batch * num_objects, latent_size), jnp.float32)
    w_slab, b_slab = pack_params(init_params(k_par, latent_size))
    sel = make_selector(batch, num_objects)

    out = cater_snitch_tracker(position, latent_state, w_slab, b_slab, sel, k_noise)
    out = jax.block_until_ready(out)
    assert out.shape == (batch, pos_channels)
    assert bool(jnp.all(jnp.isfinite(out)))
    print("KERNEL_OK")
</pallas_src>

<mosaic_0001>
module attributes {stable_mosaic.version = 11 : i64} {
  func.func @_tracker_kernel(%arg0: memref<16x3xf32, #tpu.memory_space<vmem>>, %arg1: memref<16x32xf32, #tpu.memory_space<vmem>>, %arg2: memref<5x32x32xf32, #tpu.memory_space<vmem>>, %arg3: memref<8x32xf32, #tpu.memory_space<vmem>>, %arg4: memref<6x48xf32, #tpu.memory_space<vmem>>, %arg5: memref<16x1xf32, #tpu.memory_space<vmem>>, %arg6: memref<2x3xf32, #tpu.memory_space<vmem>>) attributes {dimension_semantics = [], scalar_prefetch = 0 : i64, scratch_operands = 0 : i64, tpu.core_type = #tpu.core_type<tc>} {
    %c0 = arith.constant 0 : index
    %c0_0 = arith.constant 0 : index
    %0 = vector.load %arg1[%c0, %c0_0] : memref<16x32xf32, #tpu.memory_space<vmem>>, vector<16x32xf32>
    %c0_1 = arith.constant 0 : index
    %c0_2 = arith.constant 0 : index
    %1 = vector.load %arg3[%c0_1, %c0_2] : memref<8x32xf32, #tpu.memory_space<vmem>>, vector<8x32xf32>
    %c0_3 = arith.constant 0 : index
    %c0_4 = arith.constant 0 : index
    %c0_5 = arith.constant 0 : index
    %2 = vector.load %arg2[%c0_3, %c0_4, %c0_5] : memref<5x32x32xf32, #tpu.memory_space<vmem>>, vector<1x32x32xf32>
    %3 = vector.shape_cast %2 : vector<1x32x32xf32> to vector<32x32xf32>
    %4 = vector.extract_strided_slice %1 {offsets = [0, 0], sizes = [1, 32], strides = [1, 1]} : vector<8x32xf32> to vector<1x32xf32>
    %c1 = arith.constant 1 : index
    %c0_6 = arith.constant 0 : index
    %c0_7 = arith.constant 0 : index
    %5 = vector.load %arg2[%c1, %c0_6, %c0_7] : memref<5x32x32xf32, #tpu.memory_space<vmem>>, vector<1x32x32xf32>
    %6 = vector.shape_cast %5 : vector<1x32x32xf32> to vector<32x32xf32>
    %7 = vector.extract_strided_slice %1 {offsets = [1, 0], sizes = [1, 32], strides = [1, 1]} : vector<8x32xf32> to vector<1x32xf32>
    %cst = arith.constant 0.000000e+00 : f32
    %8 = vector.broadcast %cst : f32 to vector<16x32xf32>
    %9 = arith.maximumf %0, %8 : vector<16x32xf32>
    %cst_8 = arith.constant dense<0.000000e+00> : vector<16x32xf32>
    %10 = tpu.matmul %9, %3, %cst_8 {dimension_numbers = #tpu.dot_dimension_numbers<[1], [0], [0], [1], [0, 0, 1, 1], [], []>} : vector<16x32xf32>, vector<32x32xf32>, vector<16x32xf32> -> vector<16x32xf32>
    %11 = vector.broadcast %4 : vector<1x32xf32> to vector<16x32xf32>
    %12 = arith.addf %10, %11 : vector<16x32xf32>
    %cst_9 = arith.constant 0.000000e+00 : f32
    %13 = vector.broadcast %cst_9 : f32 to vector<16x32xf32>
    %14 = arith.maximumf %12, %13 : vector<16x32xf32>
    %cst_10 = arith.constant dense<0.000000e+00> : vector<16x32xf32>
    %15 = tpu.matmul %14, %6, %cst_10 {dimension_numbers = #tpu.dot_dimension_numbers<[1], [0], [0], [1], [0, 0, 1, 1], [], []>} : vector<16x32xf32>, vector<32x32xf32>, vector<16x32xf32> -> vector<16x32xf32>
    %16 = vector.broadcast %7 : vector<1x32xf32> to vector<16x32xf32>
    %17 = arith.addf %15, %16 : vector<16x32xf32>
    %18 = arith.addf %0, %17 : vector<16x32xf32>
    %c2 = arith.constant 2 : index
    %c0_11 = arith.constant 0 : index
    %c0_12 = arith.constant 0 : index
    %19 = vector.load %arg2[%c2, %c0_11, %c0_12] : memref<5x32x32xf32, #tpu.memory_space<vmem>>, vector<1x32x32xf32>
    %20 = vector.shape_cast %19 : vector<1x32x32xf32> to vector<32x32xf32>
    %21 = vector.extract_strided_slice %1 {offsets = [2, 0], sizes = [1, 32], strides = [1, 1]} : vector<8x32xf32> to vector<1x32xf32>
    %c3 = arith.constant 3 : index
    %c0_13 = arith.constant 0 : index
    %c0_14 = arith.constant 0 : index
    %22 = vector.load %arg2[%c3, %c0_13, %c0_14] : memref<5x32x32xf32, #tpu.memory_space<vmem>>, vector<1x32x32xf32>
    %23 = vector.shape_cast %22 : vector<1x32x32xf32> to vector<32x32xf32>
    %24 = vector.extract_strided_slice %1 {offsets = [3, 0], sizes = [1, 32], strides = [1, 1]} : vector<8x32xf32> to vector<1x32xf32>
    %cst_15 = arith.constant 0.000000e+00 : f32
    %25 = vector.broadcast %cst_15 : f32 to vector<16x32xf32>
    %26 = arith.maximumf %18, %25 : vector<16x32xf32>
    %cst_16 = arith.constant dense<0.000000e+00> : vector<16x32xf32>
    %27 = tpu.matmul %26, %20, %cst_16 {dimension_numbers = #tpu.dot_dimension_numbers<[1], [0], [0], [1], [0, 0, 1, 1], [], []>} : vector<16x32xf32>, vector<32x32xf32>, vector<16x32xf32> -> vector<16x32xf32>
    %28 = vector.broadcast %21 : vector<1x32xf32> to vector<16x32xf32>
    %29 = arith.addf %27, %28 : vector<16x32xf32>
    %cst_17 = arith.constant 0.000000e+00 : f32
    %30 = vector.broadcast %cst_17 : f32 to vector<16x32xf32>
    %31 = arith.maximumf %29, %30 : vector<16x32xf32>
    %cst_18 = arith.constant dense<0.000000e+00> : vector<16x32xf32>
    %32 = tpu.matmul %31, %23, %cst_18 {dimension_numbers = #tpu.dot_dimension_numbers<[1], [0], [0], [1], [0, 0, 1, 1], [], []>} : vector<16x32xf32>, vector<32x32xf32>, vector<16x32xf32> -> vector<16x32xf32>
    %33 = vector.broadcast %24 : vector<1x32xf32> to vector<16x32xf32>
    %34 = arith.addf %32, %33 : vector<16x32xf32>
    %35 = arith.addf %18, %34 : vector<16x32xf32>
    %cst_19 = arith.constant 0.000000e+00 : f32
    %36 = vector.broadcast %cst_19 : f32 to vector<16x32xf32>
    %37 = arith.maximumf %35, %36 : vector<16x32xf32>
    %c4 = arith.constant 4 : index
    %c0_20 = arith.constant 0 : index
    %c0_21 = arith.constant 0 : index
    %38 = vector.load %arg2[%c4, %c0_20, %c0_21] : memref<5x32x32xf32, #tpu.memory_space<vmem>>, vector<1x32x32xf32>
    %39 = vector.shape_cast %38 : vector<1x32x32xf32> to vector<32x32xf32>
    %cst_22 = arith.constant dense<0.000000e+00> : vector<16x32xf32>
    %40 = tpu.matmul %37, %39, %cst_22 {dimension_numbers = #tpu.dot_dimension_numbers<[1], [0], [0], [1], [0, 0, 1, 1], [], []>} : vector<16x32xf32>, vector<32x32xf32>, vector<16x32xf32> -> vector<16x32xf32>
    %41 = vector.extract_strided_slice %1 {offsets = [4, 0], sizes = [1, 32], strides = [1, 1]} : vector<8x32xf32> to vector<1x32xf32>
    %42 = vector.broadcast %41 : vector<1x32xf32> to vector<16x32xf32>
    %43 = arith.addf %40, %42 : vector<16x32xf32>
    %cst_23 = arith.constant 0.000000e+00 : f32
    %44 = vector.broadcast %cst_23 : f32 to vector<16x32xf32>
    %45 = arith.maximumf %43, %44 : vector<16x32xf32>
    %46 = vector.extract_strided_slice %1 {offsets = [5, 0], sizes = [1, 32], strides = [1, 1]} : vector<8x32xf32> to vector<1x32xf32>
    %47 = vector.broadcast %46 : vector<1x32xf32> to vector<16x32xf32>
    %48 = arith.mulf %45, %47 : vector<16x32xf32>
    %cst_24 = arith.constant dense<0.000000e+00> : vector<16xf32>
    %49 = vector.multi_reduction <add>, %48, %cst_24 [1] : vector<16x32xf32> to vector<16xf32>
    %50 = vector.shape_cast %49 : vector<16xf32> to vector<16x1xf32>
    %51 = vector.extract_strided_slice %1 {offsets = [6, 0], sizes = [1, 1], strides = [1, 1]} : vector<8x32xf32> to vector<1x1xf32>
    %52 = vector.broadcast %51 : vector<1x1xf32> to vector<16x1xf32>
    %53 = arith.addf %50, %52 : vector<16x1xf32>
    %cst_25 = arith.constant dense<0.000000e+00> : vector<16xf32>
    %54 = vector.multi_reduction <add>, %35, %cst_25 [1] : vector<16x32xf32> to vector<16xf32>
    %55 = vector.shape_cast %54 : vector<16xf32> to vector<16x1xf32>
    %cst_26 = arith.constant 3.200000e+01 : f32
    %56 = vector.broadcast %cst_26 : f32 to vector<16x1xf32>
    %57 = arith.divf %55, %56 : vector<16x1xf32>
    %58 = arith.addf %57, %53 : vector<16x1xf32>
    %cst_27 = arith.constant dense<0xFF800000> : vector<1xf32>
    %59 = vector.multi_reduction <maximumf>, %58, %cst_27 [0] : vector<16x1xf32> to vector<1xf32>
    %60 = vector.shape_cast %59 : vector<1xf32> to vector<1x1xf32>
    %61 = vector.broadcast %60 : vector<1x1xf32> to vector<16x1xf32>
    %62 = arith.subf %58, %61 : vector<16x1xf32>
    %63 = math.exp %62 : vector<16x1xf32>
    %c0_28 = arith.constant 0 : index
    %c0_29 = arith.constant 0 : index
    %64 = vector.load %arg5[%c0_28, %c0_29] : memref<16x1xf32, #tpu.memory_space<vmem>>, vector<16x1xf32>
    %c0_30 = arith.constant 0 : index
    %c0_31 = arith.constant 0 : index
    %65 = vector.load %arg0[%c0_30, %c0_31] : memref<16x3xf32, #tpu.memory_space<vmem>>, vector<16x3xf32>
    %66 = vector.broadcast %63 : vector<16x1xf32> to vector<16x3xf32>
    %67 = arith.mulf %65, %66 : vector<16x3xf32>
    %cst_32 = arith.constant 1.000000e+00 : f32
    %68 = vector.broadcast %cst_32 : f32 to vector<16x1xf32>
    %69 = arith.addf %68, %64 : vector<16x1xf32>
    %70 = vector.broadcast %69 : vector<16x1xf32> to vector<16x3xf32>
    %71 = arith.mulf %67, %70 : vector<16x3xf32>
    %72 = arith.mulf %63, %64 : vector<16x1xf32>
    %73 = vector.broadcast %72 : vector<16x1xf32> to vector<16x3xf32>
    %74 = arith.mulf %67, %73 : vector<16x3xf32>
    %75 = vector.shape_cast %63 : vector<16x1xf32> to vector<16x1xf32>
    %76 = vector.broadcast %75 : vector<16x1xf32> to vector<16x3xf32>
    %77 = tpu.concatenate %71, %74, %76 in 0 : vector<16x3xf32>, vector<16x3xf32>, vector<16x3xf32> -> vector<48x3xf32>
    %c0_33 = arith.constant 0 : index
    %c0_34 = arith.constant 0 : index
    %78 = vector.load %arg4[%c0_33, %c0_34] : memref<6x48xf32, #tpu.memory_space<vmem>>, vector<6x48xf32>
    %cst_35 = arith.constant dense<0.000000e+00> : vector<6x3xf32>
    %79 = tpu.matmul %78, %77, %cst_35 {dimension_numbers = #tpu.dot_dimension_numbers<[1], [0], [0], [1], [0, 0, 1, 1], [], []>} : vector<6x48xf32>, vector<48x3xf32>, vector<6x3xf32> -> vector<6x3xf32>
    %80 = vector.extract_strided_slice %79 {offsets = [4, 0], sizes = [2, 1], strides = [1, 1]} : vector<6x3xf32> to vector<2x1xf32>
    %cst_36 = arith.constant 1.000000e+00 : f32
    %81 = vector.broadcast %cst_36 : f32 to vector<2x1xf32>
    %82 = arith.divf %81, %80 : vector<2x1xf32>
    %83 = vector.extract_strided_slice %79 {offsets = [0, 0], sizes = [2, 3], strides = [1, 1]} : vector<6x3xf32> to vector<2x3xf32>
    %84 = vector.broadcast %82 : vector<2x1xf32> to vector<2x3xf32>
    %85 = arith.mulf %83, %84 : vector<2x3xf32>
    %86 = vector.extract_strided_slice %79 {offsets = [2, 0], sizes = [2, 3], strides = [1, 1]} : vector<6x3xf32> to vector<2x3xf32>
    %87 = arith.mulf %82, %82 : vector<2x1xf32>
    %88 = vector.broadcast %87 : vector<2x1xf32> to vector<2x3xf32>
    %89 = arith.mulf %86, %88 : vector<2x3xf32>
    %90 = arith.subf %85, %89 : vector<2x3xf32>
    %c0_37 = arith.constant 0 : index
    %c0_38 = arith.constant 0 : index
    %91 = vector.load %arg6[%c0_37, %c0_38] : memref<2x3xf32, #tpu.memory_space<vmem>>, vector<2x3xf32>
    tpu.vector_store %arg6[%c0_37, %c0_38], %90 {strides = array<i32>} : memref<2x3xf32, #tpu.memory_space<vmem>>, vector<2x3xf32>,
    return
  }
}

</mosaic_0001>

<llo_original>
// kernel: cater_snitch_tracker.1
$region0: #{cater_snitch_tracker.1}
  #allocation0 [shape = 'u32[]', space=smem, size = 0x4, offset = 0x4, fixed_abs, tag = 'smem constant byte address 0x4 - core index']
  #allocation1 [shape = 'u32[72,128]{1,0:T(1,128)}', space=vmem, size = 0x9000, scoped, tag = 'internal scratch']
  %s0 = inlined_call_operand.vmem [shape: f32[16,3], index: 0, kind: input, shape index: {}]
  %s1 = inlined_call_operand.vmem [shape: f32[16,32], index: 1, kind: input, shape index: {}]
  %s2 = inlined_call_operand.hbm [shape: f32[5,32,32], index: 2, kind: input, shape index: {}]
  %s3 = inlined_call_operand.vmem [shape: f32[8,32], index: 3, kind: input, shape index: {}]
  %s4 = inlined_call_operand.vmem [shape: f32[6,48], index: 4, kind: input, shape index: {}]
  %s5 = inlined_call_operand.vmem [shape: f32[16,1], index: 5, kind: input, shape index: {}]
  %s6 = inlined_call_operand.hbm [shape: f32[2,3], index: 6, kind: output, shape index: {}]
  %s7 = sld [smem:[#allocation0]]
  $region38: #{cater_snitch_tracker.1} parent=0
    _
  %s9 = ssub.s32 1, %s7
  %s10 = scalar_select 0, %s9, %s7
  $region1: #{cater_snitch_tracker.1} parent=0
    #allocation2 [shape = 'u8[81920]{0}', space=vmem, size = 0x14000, scoped, tag = 'input window, operand 2, single buffered']
    #allocation3 [shape = 's32[1]{0}', space=sflag, size = 0x4, scoped, tag = 'scoped memory for cater_snitch_tracker.1']
    #allocation4 [shape = 's32[1]{0}', space=sflag, size = 0x4, scoped, tag = 'scoped memory for cater_snitch_tracker.1']
    #allocation5 [shape = 'u8[1024]{0}', space=vmem, size = 0x400, scoped, tag = 'output window, operand 0, single buffered']
    %11 = vsyncpa [#allocation3], 0
    %12 = vsyncpa [#allocation4], 0
    // Predicated region
    $region2: #{cater_snitch_tracker.1} parent=1 // pred_check
      _
    $region3: #{cater_snitch_tracker.1} parent=1 // pred_check_branch
      %14 = sbr.rel (0) target = $region5
    $region4: #{cater_snitch_tracker.1} parent=1 // pred_region
      _
    $region5: #{cater_snitch_tracker.1} parent=1 // pred_fallthru
      _
    // Predicated region
    $region6: #{cater_snitch_tracker.1} parent=1 // pred_check
      _
    $region7: #{cater_snitch_tracker.1} parent=1 // pred_check_branch
      %16 = sbr.rel (0) target = $region9
    $region8: #{cater_snitch_tracker.1} parent=1 // pred_region
      _
    $region9: #{cater_snitch_tracker.1} parent=1 // pred_fallthru
      _
    // Predicated region
    $region10: #{cater_snitch_tracker.1} parent=1 // pred_check
      _
    $region11: #{cater_snitch_tracker.1} parent=1 // pred_check_branch
      %18 = sbr.rel (0) target = $region13
    $region12: #{cater_snitch_tracker.1} parent=1 // pred_region
      %20 = vsyncadd [#allocation3], 0
      %s21 = sshll.u32 %s2, 4
      %s22 = int_to_ptr.hbm [resolvable:$true] %s21
      %s23 = sshll.u32 [#allocation2], 4
      %s24 = int_to_ptr.vmem [resolvable:$true] %s23
      %29 = dma.hbm_to_vmem [thread:$0]  %s22, 2560, %s24, [#allocation3], 128, 128, 8
    $region13: #{cater_snitch_tracker.1} parent=1 // pred_fallthru
      _
    // Predicated region
    $region14: #{cater_snitch_tracker.1} parent=1 // pred_check
      _
    $region15: #{cater_snitch_tracker.1} parent=1 // pred_check_branch
      %31 = sbr.rel (0) target = $region17
    $region16: #{cater_snitch_tracker.1} parent=1 // pred_region
      _
    $region17: #{cater_snitch_tracker.1} parent=1 // pred_fallthru
      _
    // Predicated region
    $region18: #{cater_snitch_tracker.1} parent=1 // pred_check
      _
    $region19: #{cater_snitch_tracker.1} parent=1 // pred_check_branch
      %33 = sbr.rel (0) target = $region21
    $region20: #{cater_snitch_tracker.1} parent=1 // pred_region
      _
    $region21: #{cater_snitch_tracker.1} parent=1 // pred_fallthru
      _
    // Predicated region
    $region22: #{cater_snitch_tracker.1} parent=1 // pred_check
      _
    $region23: #{cater_snitch_tracker.1} parent=1 // pred_check_branch
      %35 = sbr.rel (0) target = $region25
    $region24: #{cater_snitch_tracker.1} parent=1 // pred_region
      _
    $region25: #{cater_snitch_tracker.1} parent=1 // pred_fallthru
      _
    // Predicated region
    $region26: #{cater_snitch_tracker.1} parent=1 // pred_check
      _
    $region27: #{cater_snitch_tracker.1} parent=1 // pred_check_branch
      %37 = sbr.rel (0) target = $region29
    $region28: #{cater_snitch_tracker.1} parent=1 // pred_region
      %39 = dma.done [#allocation3], 2560
    $region29: #{cater_snitch_tracker.1} parent=1 // pred_fallthru
      _
    %v40 = vld [vmem:[%s1] sm:$0xff]
    %v41 = vld [vmem:[%s1 + $0x8] sm:$0xff]
    %v42 = vld [vmem:[%s3] sm:$0xff]
    %v43 = vld [vmem:[#allocation2] sm:$0xff]
    %v44 = vld [vmem:[#allocation2 + $0x8] sm:$0xff]
    %v45 = vld [vmem:[#allocation2 + $0x10] sm:$0xff]
    %v46 = vld [vmem:[#allocation2 + $0x18] sm:$0xff]
    %s47 = scalar_lea.vmem [#allocation2], 32
    %v48 = vld [vmem:[%s47] sm:$0xff]
    %v49 = vld [vmem:[%s47 + $0x8] sm:$0xff]
    %v50 = vld [vmem:[%s47 + $0x10] sm:$0xff]
    %v51 = vld [vmem:[%s47 + $0x18] sm:$0xff]
    %v52 = vmax.f32 %v40, 0.0
    %v53 = vmax.f32 %v41, 0.0
    %v54 = vperm.slane %v42, 0
    %vm55 = vcmask 261120
    %v57 = vsel %vm55, %v52, 0
    %v60 = vsel %vm55, %v53, 0
    %62 = vmatpush.msra.mxu0 0.0
    %63 = vmatpush.msra.mxu0 0.0
    %64 = vmatpush.msra.mxu0 0.0
    %65 = vmatpush.msra.mxu0 0.0
    %66 = vmatpush.msra.mxu0 0.0
    %67 = vmatpush.msra.mxu0 0.0
    %68 = vmatpush.msra.mxu0 0.0
    %69 = vmatpush.msra.mxu0 0.0
    %70 = vmatpush.msra.mxu0 0.0
    %71 = vmatpush.msra.mxu0 0.0
    %72 = vmatpush.msra.mxu0 0.0
    %73 = vmatpush.msra.mxu0 0.0
    %74 = vmatpush.msra.mxu0 %v46
    %75 = vmatpush.msra.mxu0 %v45
    %76 = vmatpush.msra.mxu0 %v44
    %77 = vmatpush.msra.mxu0 %v43
    %78 = vmatmul.f32.gmra.mxu0 %v57
    %v79 = vpop.f32.mrf.mxu0
    %v80 = vadd.f32 %v54, %v79
    %81 = vmatmul.f32.gmra.mxu0 %v60
    %v82 = vpop.f32.mrf.mxu0
    %v83 = vadd.f32 %v54, %v82
    %84 = vdwg.mxu0
    %v85 = vmax.f32 %v80, 0.0
    %v86 = vmax.f32 %v83, 0.0
    %v87 = vperm.slane %v42, 1
    %v89 = vsel %vm55, %v85, 0
    %v92 = vsel %vm55, %v86, 0
    %94 = vmatpush.msra.mxu0 0.0
    %95 = vmatpush.msra.mxu0 0.0
    %96 = vmatpush.msra.mxu0 0.0
    %97 = vmatpush.msra.mxu0 0.0
    %98 = vmatpush.msra.mxu0 0.0
    %99 = vmatpush.msra.mxu0 0.0
    %100 = vmatpush.msra.mxu0 0.0
    %101 = vmatpush.msra.mxu0 0.0
    %102 = vmatpush.msra.mxu0 0.0
    %103 = vmatpush.msra.mxu0 0.0
    %104 = vmatpush.msra.mxu0 0.0
    %105 = vmatpush.msra.mxu0 0.0
    %106 = vmatpush.msra.mxu0 %v51
    %107 = vmatpush.msra.mxu0 %v50
    %108 = vmatpush.msra.mxu0 %v49
    %109 = vmatpush.msra.mxu0 %v48
    %110 = vmatmul.f32.gmra.mxu0 %v89
    %v111 = vpop.f32.mrf.mxu0
    %v112 = vadd.f32 %v87, %v111
    %113 = vmatmul.f32.gmra.mxu0 %v92
    %v114 = vpop.f32.mrf.mxu0
    %v115 = vadd.f32 %v87, %v114
    %116 = vdwg.mxu0
    %v117 = vadd.f32 %v40, %v112
    %v118 = vadd.f32 %v41, %v115
    %s119 = scalar_lea.vmem [#allocation2], 64
    %v120 = vld [vmem:[%s119] sm:$0xff]
    %v121 = vld [vmem:[%s119 + $0x8] sm:$0xff]
    %v122 = vld [vmem:[%s119 + $0x10] sm:$0xff]
    %v123 = vld [vmem:[%s119 + $0x18] sm:$0xff]
    %s124 = scalar_lea.vmem [#allocation2], 96
    %v125 = vld [vmem:[%s124] sm:$0xff]
    %v126 = vld [vmem:[%s124 + $0x8] sm:$0xff]
    %v127 = vld [vmem:[%s124 + $0x10] sm:$0xff]
    %v128 = vld [vmem:[%s124 + $0x18] sm:$0xff]
    %v129 = vmax.f32 %v117, 0.0
    %v130 = vmax.f32 %v118, 0.0
    %v131 = vperm.slane %v42, 2
    %v133 = vsel %vm55, %v129, 0
    %v136 = vsel %vm55, %v130, 0
    %138 = vmatpush.msra.mxu0 0.0
    %139 = vmatpush.msra.mxu0 0.0
    %140 = vmatpush.msra.mxu0 0.0
    %141 = vmatpush.msra.mxu0 0.0
    %142 = vmatpush.msra.mxu0 0.0
    %143 = vmatpush.msra.mxu0 0.0
    %144 = vmatpush.msra.mxu0 0.0
    %145 = vmatpush.msra.mxu0 0.0
    %146 = vmatpush.msra.mxu0 0.0
    %147 = vmatpush.msra.mxu0 0.0
    %148 = vmatpush.msra.mxu0 0.0
    %149 = vmatpush.msra.mxu0 0.0
    %150 = vmatpush.msra.mxu0 %v123
    %151 = vmatpush.msra.mxu0 %v122
    %152 = vmatpush.msra.mxu0 %v121
    %153 = vmatpush.msra.mxu0 %v120
    %154 = vmatmul.f32.gmra.mxu0 %v133
    %v155 = vpop.f32.mrf.mxu0
    %v156 = vadd.f32 %v131, %v155
    %157 = vmatmul.f32.gmra.mxu0 %v136
    %v158 = vpop.f32.mrf.mxu0
    %v159 = vadd.f32 %v131, %v158
    %160 = vdwg.mxu0
    %v161 = vmax.f32 %v156, 0.0
    %v162 = vmax.f32 %v159, 0.0
    %v163 = vperm.slane %v42, 3
    %v165 = vsel %vm55, %v161, 0
    %v168 = vsel %vm55, %v162, 0
    %170 = vmatpush.msra.mxu0 0.0
    %171 = vmatpush.msra.mxu0 0.0
    %172 = vmatpush.msra.mxu0 0.0
    %173 = vmatpush.msra.mxu0 0.0
    %174 = vmatpush.msra.mxu0 0.0
    %175 = vmatpush.msra.mxu0 0.0
    %176 = vmatpush.msra.mxu0 0.0
    %177 = vmatpush.msra.mxu0 0.0
    %178 = vmatpush.msra.mxu0 0.0
    %179 = vmatpush.msra.mxu0 0.0
    %180 = vmatpush.msra.mxu0 0.0
    %181 = vmatpush.msra.mxu0 0.0
    %182 = vmatpush.msra.mxu0 %v128
    %183 = vmatpush.msra.mxu0 %v127
    %184 = vmatpush.msra.mxu0 %v126
    %185 = vmatpush.msra.mxu0 %v125
    %186 = vmatmul.f32.gmra.mxu0 %v165
    %v187 = vpop.f32.mrf.mxu0
    %v188 = vadd.f32 %v163, %v187
    %189 = vmatmul.f32.gmra.mxu0 %v168
    %v190 = vpop.f32.mrf.mxu0
    %v191 = vadd.f32 %v163, %v190
    %192 = vdwg.mxu0
    %v193 = vadd.f32 %v117, %v188
    %v194 = vadd.f32 %v118, %v191
    %v195 = vmax.f32 %v193, 0.0
    %v196 = vmax.f32 %v194, 0.0
    %s197 = scalar_lea.vmem [#allocation2], 128
    %v198 = vld [vmem:[%s197] sm:$0xff]
    %v199 = vld [vmem:[%s197 + $0x8] sm:$0xff]
    %v200 = vld [vmem:[%s197 + $0x10] sm:$0xff]
    %v201 = vld [vmem:[%s197 + $0x18] sm:$0xff]
    %v202 = vperm.slane %v42, 4
    %v204 = vsel %vm55, %v195, 0
    %v207 = vsel %vm55, %v196, 0
    %209 = vmatpush.msra.mxu0 0.0
    %210 = vmatpush.msra.mxu0 0.0
    %211 = vmatpush.msra.mxu0 0.0
    %212 = vmatpush.msra.mxu0 0.0
    %213 = vmatpush.msra.mxu0 0.0
    %214 = vmatpush.msra.mxu0 0.0
    %215 = vmatpush.msra.mxu0 0.0
    %216 = vmatpush.msra.mxu0 0.0
    %217 = vmatpush.msra.mxu0 0.0
    %218 = vmatpush.msra.mxu0 0.0
    %219 = vmatpush.msra.mxu0 0.0
    %220 = vmatpush.msra.mxu0 0.0
    %221 = vmatpush.msra.mxu0 %v201
    %222 = vmatpush.msra.mxu0 %v200
    %223 = vmatpush.msra.mxu0 %v199
    %224 = vmatpush.msra.mxu0 %v198
    %225 = vmatmul.f32.gmra.mxu0 %v204
    %v226 = vpop.f32.mrf.mxu0
    %v227 = vadd.f32 %v202, %v226
    %228 = vmatmul.f32.gmra.mxu0 %v207
    %v229 = vpop.f32.mrf.mxu0
    %v230 = vadd.f32 %v202, %v229
    %231 = vdwg.mxu0
    %v232 = vmax.f32 %v227, 0.0
    %v233 = vmax.f32 %v230, 0.0
    %v234 = vperm.slane %v42, 5
    %v235 = vmul.f32 %v232, %v234
    %v236 = vmul.f32 %v233, %v234
    %v237 = vsel %vm55, %v235, 0.0
    %238 = vadd.xlane.f32.xlu0 %v237
    %v239 = vpop.xlane.xlu0 %238
    %v240 = vsel %vm55, %v236, 0.0
    %241 = vadd.xlane.f32.xlu0 %v240
    %v242 = vpop.xlane.xlu0 %241
    %v243 = vperm.slane %v42, 6
    %v244 = vadd.f32 %v239, %v243
    %v245 = vadd.f32 %v242, %v243
    %v246 = vsel %vm55, %v193, 0.0
    %247 = vadd.xlane.f32.xlu0 %v246
    %v248 = vpop.xlane.xlu0 %247
    %v249 = vsel %vm55, %v194, 0.0
    %250 = vadd.xlane.f32.xlu0 %v249
    %v251 = vpop.xlane.xlu0 %250
    %v252 = vrcp.pop 32.0
    %v253 = vmul.f32 32.0, %v252
    %v254 = vsub.f32 1.0, %v253
    %v255 = vmul.f32 %v252, %v254
    %v256 = vadd.f32 %v252, %v255
    %vm257 = vweird.f32 %v252
    %v258 = vsel %vm257, %v252, %v256
    %v259 = vmul.f32 %v248, %v258
    %v260 = vmul.f32 %v251, %v258
    %v261 = vadd.f32 %v259, %v244
    %v262 = vadd.f32 %v260, %v245
    %vm263 = vcmask 7168
    %v264 = vsel %vm263, %v261, -inf
    %v265 = vsel %vm263, %v262, -inf
    %v266 = vmax.f32 %v264, %v265
    %v267 = vrot.slane %v266, 4
    %v268 = vmax.f32 %v266, %v267
    %v269 = vrot.slane %v268, 2
    %v270 = vmax.f32 %v268, %v269
    %v271 = vrot.slane %v270, 1
    %v272 = vmax.f32 %v270, %v271
    %v273 = vsub.f32 %v261, %v272
    %v274 = vsub.f32 %v262, %v272
    %v275 = vmul.f32 %v273, 1.442695
    %v276 = vpow.pop %v275
    %v277 = vmul.f32 %v274, 1.442695
    %v278 = vpow.pop %v277
    %v279 = vld [vmem:[%s5] sm:$0xff]
    %v280 = vld [vmem:[%s5 + $0x8] sm:$0xff]
    %v281 = vld [vmem:[%s0] sm:$0xff]
    %v282 = vld [vmem:[%s0 + $0x8] sm:$0xff]
    %284 = vset.pattern.permute.xlu0 0
    %285 = vperm.xlu0 %284, %v276
    %v286 = vpop.permute.xlu0 %285
    %289 = vset.pattern.permute.xlu0 0
    %290 = vperm.xlu0 %289, %v278
    %v291 = vpop.permute.xlu0 %290
    %v293 = vmul.f32 %v281, %v286
    %v294 = vmul.f32 %v282, %v291
    %v295 = vadd.f32 %v279, 1.0
    %v296 = vadd.f32 %v280, 1.0
    %298 = vset.pattern.permute.xlu0 0
    %299 = vperm.xlu0 %298, %v295
    %v300 = vpop.permute.xlu0 %299
    %303 = vset.pattern.permute.xlu0 0
    %304 = vperm.xlu0 %303, %v296
    %v305 = vpop.permute.xlu0 %304
    %v307 = vmul.f32 %v293, %v300
    %v308 = vmul.f32 %v294, %v305
    %v309 = vmul.f32 %v276, %v279
    %v310 = vmul.f32 %v278, %v280
    %312 = vset.pattern.permute.xlu0 0
    %313 = vperm.xlu0 %312, %v309
    %v314 = vpop.permute.xlu0 %313
    %317 = vset.pattern.permute.xlu0 0
    %318 = vperm.xlu0 %317, %v310
    %v319 = vpop.permute.xlu0 %318
    %v321 = vmul.f32 %v293, %v314
    %v322 = vmul.f32 %v294, %v319
    %v323 = vld [vmem:[%s4] sm:$0x3f]
    %vm324 = vcmask 392192
    %v326 = vsel %vm324, %v323, 0
    %328 = vmatpush.msra.mxu0 0.0
    %329 = vmatpush.msra.mxu0 0.0
    %330 = vmatpush.msra.mxu0 0.0
    %331 = vmatpush.msra.mxu0 0.0
    %332 = vmatpush.msra.mxu0 0.0
    %333 = vmatpush.msra.mxu0 0.0
    %334 = vmatpush.msra.mxu0 0.0
    %335 = vmatpush.msra.mxu0 0.0
    %336 = vmatpush.msra.mxu0 0.0
    %337 = vmatpush.msra.mxu0 0.0
    %338 = vmatpush.msra.mxu0 %v291
    %339 = vmatpush.msra.mxu0 %v286
    %340 = vmatpush.msra.mxu0 %v322
    %341 = vmatpush.msra.mxu0 %v321
    %342 = vmatpush.msra.mxu0 %v308
    %343 = vmatpush.msra.mxu0 %v307
    %344 = vmatmul.f32.gmra.mxu0 %v326
    %v345 = vpop.f32.mrf.mxu0
    %v346 = vadd.f32 0.0, %v345
    %347 = vdwg.mxu0
    %v348 = vrcp.pop %v346
    %v349 = vmul.f32 %v346, %v348
    %v350 = vsub.f32 1.0, %v349
    %v351 = vmul.f32 %v348, %v350
    %v352 = vadd.f32 %v348, %v351
    %vm353 = vweird.f32 %v346
    %vm354 = vweird.f32 %v348
    %vm355 = vmor %vm353, %vm354
    %v356 = vsel %vm355, %v348, %v352
    %v357 = vand.u32 2147483647, %v346
    %vm358 = vcmp.eq.f32.partialorder %v357, 8.507059e+37
    %v359 = vand.u32 %v346, 2147483648
    %v360 = vor.u32 1.1754944e-38, %v359
    %v361 = vsel %vm358, %v360, %v356
    %v362 = vmul.f32 1.0, %v361
    %364 = vset.pattern.permute.xlu0 0
    %365 = vperm.xlu0 %364, %v362
    %v366 = vpop.permute.xlu0 %365
    %v367 = vrot.slane %v366, 4
    %v369 = vmul.f32 %v346, %v367
    %v370 = vmul.f32 %v362, %v362
    %372 = vset.pattern.permute.xlu0 0
    %373 = vperm.xlu0 %372, %v370
    %v374 = vpop.permute.xlu0 %373
    %v375 = vrot.slane %v374, 2
    %v377 = vmul.f32 %v346, %v375
    %v379 = vrot.slane %v377, 2
    %v381 = vsub.f32 %v369, %v379
    %vm382 = vcmask 17408
    %383 = vst.msk [vmem:[#allocation5] sm:$0x3] %vm382, %v381
    // Predicated region
    $region30: #{cater_snitch_tracker.1} parent=1 // pred_check
      _
    $region31: #{cater_snitch_tracker.1} parent=1 // pred_check_branch
      %385 = sbr.rel (0) target = $region33
    $region32: #{cater_snitch_tracker.1} parent=1 // pred_region
      %387 = vsyncadd [#allocation4], 0
      %s389 = sshll.u32 [#allocation5], 4
      %s390 = int_to_ptr.vmem [resolvable:$true] %s389
      %s391 = sshll.u32 %s6, 4
      %s392 = int_to_ptr.hbm [resolvable:$true] %s391
      %394 = dma.vmem_to_hbm [thread:$0]  %s390, 32, %s392, [#allocation4]
    $region33: #{cater_snitch_tracker.1} parent=1 // pred_fallthru
      _
    // Predicated region
    $region34: #{cater_snitch_tracker.1} parent=1 // pred_check
      _
    $region35: #{cater_snitch_tracker.1} parent=1 // pred_check_branch
      %396 = sbr.rel (0) target = $region37
    $region36: #{cater_snitch_tracker.1} parent=1 // pred_region
      %398 = dma.done [#allocation4], 32
    $region37: #{cater_snitch_tracker.1} parent=1 // pred_fallthru
      _
    %399 = vsyncpa [#allocation3], 1
    %400 = vsyncpa [#allocation4], 1

</llo_original>
